<compile_context>
chip_gen: v5e
topology: v5e:2x2
jax: 0.10.0
libtpu: 0.0.40
codegen_flags: <defaults>
</compile_context>

<pallas_src>
import jax
import jax.numpy as jnp
from jax.experimental import pallas as pl
from jax.experimental.pallas import tpu as pltpu


def _round_up(x, m):
    return ((x + m - 1) // m) * m


# ---------------------------------------------------------------------------
# Pallas kernel: batched embedding gather expressed as a one-hot MXU matmul.
# ---------------------------------------------------------------------------
def _embed_onehot_kernel(labels_ref, table_ref, out_ref):
    # labels_ref : (TB, 1) int32   (VMEM)
    # table_ref  : (V, H)          (VMEM, resident across the whole grid)
    # out_ref    : (TB, H)
    tb = out_ref.shape[0]
    v = table_ref.shape[0]
    labels = labels_ref[...]                                   # (TB, 1)
    cols = jax.lax.broadcasted_iota(jnp.int32, (tb, v), 1)     # (TB, V)
    onehot = (cols == labels).astype(table_ref.dtype)          # (TB, V)
    out_ref[...] = jnp.dot(
        onehot,
        table_ref[...],
        preferred_element_type=jnp.float32,
        precision=jax.lax.Precision.HIGHEST,  # exact row reproduction for f32 tables
    ).astype(out_ref.dtype)


def embedding_lookup(labels_1d, table, *, block_b=128):
    """table[labels_1d[i], :] for each i, via a batched one-hot-matmul Pallas kernel.

    labels_1d : (B,) integer
    table     : (V, H)
    returns   : (B, H) in table.dtype
    """
    B = labels_1d.shape[0]
    V, H = table.shape

    # Bounds safety: an out-of-range label must never become an OOB read.
    labels = jnp.clip(labels_1d.astype(jnp.int32), 0, V - 1)

    # Sublane-dense batch tile: multiple of 8, at most `block_b` rows per step.
    TB = min(block_b, _round_up(B, 8))
    padded_B = _round_up(B, TB)
    if padded_B != B:
        labels = jnp.pad(labels, (0, padded_B - B))
    labels2d = labels.reshape(padded_B, 1)

    # VMEM budget: resident table (x2 for potential double-buffering) plus
    # double-buffered label / output tiles.  Only raise the scoped limit when the
    # default (32 MiB) is not enough.  Very large tables should be stored in bf16
    # or tiled over V.
    # TODO(synk): add a V-tiled reduction path for tables that do not fit VMEM.
    itemsize = jnp.dtype(table.dtype).itemsize
    needed = (2 * V * H * itemsize
              + 2 * TB * H * (itemsize + 4)
              + 2 * TB * 4
              + (1 << 20))
    vmem_limit = needed if needed > (32 << 20) else None

    out = pl.pallas_call(
        _embed_onehot_kernel,
        out_shape=jax.ShapeDtypeStruct((padded_B, H), table.dtype),
        grid_spec=pltpu.PrefetchScalarGridSpec(
            num_scalar_prefetch=0,
            grid=(padded_B // TB,),
            in_specs=[
                pl.BlockSpec((TB, 1), lambda i: (i, 0)),  # label tile
                pl.BlockSpec((V, H), lambda i: (0, 0)),   # whole table, fetched once
            ],
            out_specs=pl.BlockSpec((TB, H), lambda i: (i, 0)),
        ),
        compiler_params=pltpu.CompilerParams(
            dimension_semantics=("parallel",),  # independent tiles -> both TCs on v7x
            vmem_limit_bytes=vmem_limit,
        ),
    )(labels2d, table)
    return out[:B]


# ---------------------------------------------------------------------------
# LabelEmbedder module (JAX wrapper around the Pallas gather kernel).
# ---------------------------------------------------------------------------
class LabelEmbedder:
    """Embeds class labels into vectors; handles CFG label-dropout."""

    def __init__(self, num_classes, hidden_size, dropout_prob=0.1, *,
                 param_key, param_dtype=jnp.float32):
        use_cfg_embedding = int(dropout_prob > 0)
        vocab = num_classes + use_cfg_embedding
        # nn.Embedding default init is N(0, 1).  (Use param_dtype=jnp.bfloat16 to
        # halve HBM traffic / VMEM residency if exact f32 params are not required.)
        self.embedding_table = jax.random.normal(
            param_key, (vocab, hidden_size)).astype(param_dtype)
        self.num_classes = num_classes
        self.dropout_prob = dropout_prob

    def token_drop(self, labels, drop_key=None, force_drop_ids=None):
        if force_drop_ids is None:
            drop_ids = (
                jax.random.uniform(drop_key, (labels.shape[0],)) < self.dropout_prob
            )
        else:
            drop_ids = force_drop_ids == 1
        return jnp.where(drop_ids, self.num_classes, labels)

    def __call__(self, labels, train, drop_key=None, force_drop_ids=None):
        use_dropout = self.dropout_prob > 0
        labels = jnp.squeeze(labels, axis=-1)                        # (B,)
        if (train and use_dropout) or (force_drop_ids is not None):
            labels = self.token_drop(labels, drop_key, force_drop_ids)
        embeddings = embedding_lookup(labels, self.embedding_table)  # (B, H)
        return embeddings[:, None, :]                                # (B, 1, H)


# ---------------------------------------------------------------------------
if __name__ == "__main__":
    key = jax.random.PRNGKey(0)
    k_param, k_labels, k_drop = jax.random.split(key, 3)

    num_classes = 10
    hidden_size = 128
    batch = 4

    embedder = LabelEmbedder(num_classes, hidden_size, dropout_prob=0.1,
                             param_key=k_param)

    labels = jax.random.randint(k_labels, (batch, 1), 0, num_classes, dtype=jnp.int32)

    # Eval path (deterministic).
    out_eval = jax.block_until_ready(embedder(labels, train=False))

    # Train path exercises the stochastic CFG token-drop branch.
    out_train = jax.block_until_ready(embedder(labels, train=True, drop_key=k_drop))

    # Forced-drop path exercises the extra CFG "null class" row deterministically.
    force_ids = jnp.array([1, 0, 0, 1], dtype=jnp.int32)
    out_forced = jax.block_until_ready(
        embedder(labels, train=False, force_drop_ids=force_ids))

    # Pure-JAX references.
    lbl = jnp.squeeze(labels, -1)
    ref_eval = embedder.embedding_table[lbl][:, None, :]
    lbl_forced = jnp.where(force_ids == 1, num_classes, lbl)
    ref_forced = embedder.embedding_table[lbl_forced][:, None, :]

    assert out_eval.shape == (batch, 1, hidden_size)
    assert out_train.shape == (batch, 1, hidden_size)
    assert out_forced.shape == (batch, 1, hidden_size)
    assert jnp.allclose(out_eval, ref_eval, rtol=1e-6, atol=1e-6)
    assert jnp.allclose(out_forced, ref_forced, rtol=1e-6, atol=1e-6)

    print("KERNEL_OK")
</pallas_src>

<mosaic_0001>
module attributes {stable_mosaic.version = 11 : i64} {
  func.func @_embed_onehot_kernel(%arg0: i32, %arg1: memref<8x1xi32, #tpu.memory_space<vmem>>, %arg2: memref<11x128xf32, #tpu.memory_space<vmem>>, %arg3: memref<8x128xf32, #tpu.memory_space<vmem>>) attributes {dimension_semantics = [#tpu.dimension_semantics<parallel>], iteration_bounds = array<i64: 1>, scalar_prefetch = 0 : i64, scratch_operands = 0 : i64, tpu.core_type = #tpu.core_type<tc>, window_params = [{transform_indices = @transform_0, window_bounds = array<i64: 8, 1>}, {pipeline_mode = #tpu.pipeline_mode<synchronous>, transform_indices = @transform_1, window_bounds = array<i64: 11, 128>}, {transform_indices = @transform_2, window_bounds = array<i64: 8, 128>}]} {
    %c0 = arith.constant 0 : index
    %c0_0 = arith.constant 0 : index
    %0 = vector.load %arg1[%c0, %c0_0] : memref<8x1xi32, #tpu.memory_space<vmem>>, vector<8x1xi32>
    %1 = tpu.iota {dimensions = array<i32: 1>} : vector<8x11xi32>
    %2 = vector.broadcast %0 : vector<8x1xi32> to vector<8x11xi32>
    %3 = arith.cmpi eq, %1, %2 : vector<8x11xi32>
    %4 = arith.extui %3 : vector<8x11xi1> to vector<8x11xi32>
    %5 = arith.sitofp %4 : vector<8x11xi32> to vector<8x11xf32>
    %c0_1 = arith.constant 0 : index
    %c0_2 = arith.constant 0 : index
    %6 = vector.load %arg2[%c0_1, %c0_2] : memref<11x128xf32, #tpu.memory_space<vmem>>, vector<11x128xf32>
    %cst = arith.constant dense<0.000000e+00> : vector<8x128xf32>
    %7 = tpu.matmul %5, %6, %cst {dimension_numbers = #tpu.dot_dimension_numbers<[1], [0], [0], [1], [0, 0, 1, 1], [], []>, precision = #tpu.contract_precision<fp32>} : vector<8x11xf32>, vector<11x128xf32>, vector<8x128xf32> -> vector<8x128xf32>
    %c0_3 = arith.constant 0 : index
    %c0_4 = arith.constant 0 : index
    %8 = vector.load %arg3[%c0_3, %c0_4] : memref<8x128xf32, #tpu.memory_space<vmem>>, vector<8x128xf32>
    tpu.vector_store %arg3[%c0_3, %c0_4], %7 {strides = array<i32>} : memref<8x128xf32, #tpu.memory_space<vmem>>, vector<8x128xf32>,
    return
  }
  func.func @transform_0(%arg0: i32) -> (i32, i32) {
    %c0_i32 = arith.constant 0 : i32
    %c0_i32_0 = arith.constant 0 : i32
    return %arg0, %c0_i32 : i32, i32
  }
  func.func @transform_1(%arg0: i32) -> (i32, i32) {
    %c0_i32 = arith.constant 0 : i32
    %c0_i32_0 = arith.constant 0 : i32
    %c0_i32_1 = arith.constant 0 : i32
    return %c0_i32, %c0_i32_0 : i32, i32
  }
  func.func @transform_2(%arg0: i32) -> (i32, i32) {
    %c0_i32 = arith.constant 0 : i32
    %c0_i32_0 = arith.constant 0 : i32
    return %arg0, %c0_i32 : i32, i32
  }
}

</mosaic_0001>

<llo_original>
// kernel: tpu_custom_call.1
$region0: #{tpu_custom_call.1}
  #allocation0 [shape = 'u32[]', space=smem, size = 0x4, offset = 0x4, fixed_abs, tag = 'smem constant byte address 0x4 - core index']
  #allocation1 [shape = 'u32[72,128]{1,0:T(1,128)}', space=vmem, size = 0x9000, scoped, tag = 'internal scratch']
  %s0 = inlined_call_operand.vmem [shape: s32[8,1], index: 0, kind: input, shape index: {}]
  %s1 = inlined_call_operand.hbm [shape: f32[11,128], index: 1, kind: input, shape index: {}]
  %s2 = inlined_call_operand.hbm [shape: f32[8,128], index: 2, kind: output, shape index: {}]
  %s3 = sld [smem:[#allocation0]]
  $region22: #{tpu_custom_call.1} parent=0
    _
  %s5 = ssub.s32 1, %s3
  %s6 = scalar_select 0, %s5, %s3
  $region1: #{tpu_custom_call.1} parent=0
    #allocation2 [shape = 'u8[8192]{0}', space=vmem, size = 0x2000, scoped, tag = 'input window, operand 1, single buffered']
    #allocation3 [shape = 's32[1]{0}', space=sflag, size = 0x4, scoped, tag = 'scoped memory for tpu_custom_call.1']
    #allocation4 [shape = 's32[1]{0}', space=sflag, size = 0x4, scoped, tag = 'scoped memory for tpu_custom_call.1']
    #allocation5 [shape = 'u8[4096]{0}', space=vmem, size = 0x1000, scoped, tag = 'output window, operand 0, single buffered']
    %7 = vsyncpa [#allocation3], 0
    %8 = vsyncpa [#allocation4], 0
    // Predicated region
    $region2: #{tpu_custom_call.1} parent=1 // pred_check
      _
    $region3: #{tpu_custom_call.1} parent=1 // pred_check_branch
      %10 = sbr.rel (0) target = $region5
    $region4: #{tpu_custom_call.1} parent=1 // pred_region
      _
    $region5: #{tpu_custom_call.1} parent=1 // pred_fallthru
      _
    // Predicated region
    $region6: #{tpu_custom_call.1} parent=1 // pred_check
      _
    $region7: #{tpu_custom_call.1} parent=1 // pred_check_branch
      %12 = sbr.rel (0) target = $region9
    $region8: #{tpu_custom_call.1} parent=1 // pred_region
      %14 = vsyncadd [#allocation3], 0
      %s15 = sshll.u32 %s1, 4
      %s16 = int_to_ptr.hbm [resolvable:$true] %s15
      %s17 = sshll.u32 [#allocation2], 4
      %s18 = int_to_ptr.vmem [resolvable:$true] %s17
      %23 = dma.hbm_to_vmem [thread:$0]  %s16, 256, %s18, [#allocation3], 128, 128, 8
    $region9: #{tpu_custom_call.1} parent=1 // pred_fallthru
      _
    // Predicated region
    $region10: #{tpu_custom_call.1} parent=1 // pred_check
      _
    $region11: #{tpu_custom_call.1} parent=1 // pred_check_branch
      %25 = sbr.rel (0) target = $region13
    $region12: #{tpu_custom_call.1} parent=1 // pred_region
      %27 = dma.done [#allocation3], 256
    $region13: #{tpu_custom_call.1} parent=1 // pred_fallthru
      _
    %v28 = vld [vmem:[%s0] sm:$0xff]
    %v29 = vlaneseq
    %v30 = vand.u32 %v29, 127
    %31 = vset.pattern.permute.xlu0 0
    %32 = vperm.xlu0 %31, %v28
    %v33 = vpop.permute.xlu0 %32
    %vm34 = vcmp.eq.s32.totalorder %v30, %v33
    %v35 = vsel %vm34, 1, 0
    %v36 = vcvt.s32.f32 %v35
    %v37 = vld [vmem:[#allocation2] sm:$0xff]
    %v38 = vld [vmem:[#allocation2 + $0x8] sm:$0x7]
    %vm39 = vcmask 89088
    %v41 = vsel %vm39, %v36, 0
    %vm43 = vcmask 1042432
    %v45 = vsel %vm43, %v38, 0
    %47 = vmatpush.msra.mxu0 0.0
    %48 = vmatpush.msra.mxu0 0.0
    %49 = vmatpush.msra.mxu0 0.0
    %50 = vmatpush.msra.mxu0 0.0
    %51 = vmatpush.msra.mxu0 0.0
    %52 = vmatpush.msra.mxu0 0.0
    %53 = vmatpush.msra.mxu0 0.0
    %54 = vmatpush.msra.mxu0 0.0
    %55 = vmatpush.msra.mxu0 0.0
    %56 = vmatpush.msra.mxu0 0.0
    %57 = vmatpush.msra.mxu0 0.0
    %58 = vmatpush.msra.mxu0 0.0
    %59 = vmatpush.msra.mxu0 0.0
    %60 = vmatpush.msra.mxu0 0.0
    %v61 = vand.u32 %v45, 4294901760
    %62 = vmatpush.msra.mxu0 %v61
    %v63 = vand.u32 %v37, 4294901760
    %64 = vmatpush.msra.mxu0 %v63
    %v65 = vand.u32 %v41, 4294901760
    %v66 = vsub.f32 %v41, %v65
    %v67 = vand.u32 %v66, 4294901760
    %v68 = vsub.f32 %v66, %v67
    %v69 = vand.u32 %v68, 4294901760
    %70 = vmatmul.f32.gmra.mxu0 %v69
    %v71 = vpop.f32.mrf.mxu0
    %v72 = vadd.f32 0.0, %v71
    %73 = vdwg.mxu0
    %74 = vmatpush.msra.mxu0 0.0
    %75 = vmatpush.msra.mxu0 0.0
    %76 = vmatpush.msra.mxu0 0.0
    %77 = vmatpush.msra.mxu0 0.0
    %78 = vmatpush.msra.mxu0 0.0
    %79 = vmatpush.msra.mxu0 0.0
    %80 = vmatpush.msra.mxu0 0.0
    %81 = vmatpush.msra.mxu0 0.0
    %82 = vmatpush.msra.mxu0 0.0
    %83 = vmatpush.msra.mxu0 0.0
    %84 = vmatpush.msra.mxu0 0.0
    %85 = vmatpush.msra.mxu0 0.0
    %86 = vmatpush.msra.mxu0 0.0
    %87 = vmatpush.msra.mxu0 0.0
    %v88 = vand.u32 %v45, 4294901760
    %v89 = vsub.f32 %v45, %v88
    %v90 = vand.u32 %v89, 4294901760
    %v91 = vsub.f32 %v89, %v90
    %v92 = vand.u32 %v91, 4294901760
    %93 = vmatpush.msra.mxu0 %v92
    %v94 = vand.u32 %v37, 4294901760
    %v95 = vsub.f32 %v37, %v94
    %v96 = vand.u32 %v95, 4294901760
    %v97 = vsub.f32 %v95, %v96
    %v98 = vand.u32 %v97, 4294901760
    %99 = vmatpush.msra.mxu0 %v98
    %v100 = vand.u32 %v41, 4294901760
    %101 = vmatmul.f32.gmra.mxu0 %v100
    %v102 = vpop.f32.mrf.mxu0
    %v103 = vadd.f32 %v72, %v102
    %104 = vdwg.mxu0
    %105 = vmatpush.msra.mxu0 0.0
    %106 = vmatpush.msra.mxu0 0.0
    %107 = vmatpush.msra.mxu0 0.0
    %108 = vmatpush.msra.mxu0 0.0
    %109 = vmatpush.msra.mxu0 0.0
    %110 = vmatpush.msra.mxu0 0.0
    %111 = vmatpush.msra.mxu0 0.0
    %112 = vmatpush.msra.mxu0 0.0
    %113 = vmatpush.msra.mxu0 0.0
    %114 = vmatpush.msra.mxu0 0.0
    %115 = vmatpush.msra.mxu0 0.0
    %116 = vmatpush.msra.mxu0 0.0
    %117 = vmatpush.msra.mxu0 0.0
    %118 = vmatpush.msra.mxu0 0.0
    %v119 = vand.u32 %v45, 4294901760
    %v120 = vsub.f32 %v45, %v119
    %121 = vmatpush.msra.mxu0 %v120
    %v122 = vand.u32 %v37, 4294901760
    %v123 = vsub.f32 %v37, %v122
    %124 = vmatpush.msra.mxu0 %v123
    %v125 = vand.u32 %v41, 4294901760
    %v126 = vsub.f32 %v41, %v125
    %127 = vmatmul.f32.gmra.mxu0 %v126
    %v128 = vpop.f32.mrf.mxu0
    %v129 = vadd.f32 %v103, %v128
    %130 = vdwg.mxu0
    %131 = vmatpush.msra.mxu0 0.0
    %132 = vmatpush.msra.mxu0 0.0
    %133 = vmatpush.msra.mxu0 0.0
    %134 = vmatpush.msra.mxu0 0.0
    %135 = vmatpush.msra.mxu0 0.0
    %136 = vmatpush.msra.mxu0 0.0
    %137 = vmatpush.msra.mxu0 0.0
    %138 = vmatpush.msra.mxu0 0.0
    %139 = vmatpush.msra.mxu0 0.0
    %140 = vmatpush.msra.mxu0 0.0
    %141 = vmatpush.msra.mxu0 0.0
    %142 = vmatpush.msra.mxu0 0.0
    %143 = vmatpush.msra.mxu0 0.0
    %144 = vmatpush.msra.mxu0 0.0
    %v145 = vand.u32 %v45, 4294901760
    %146 = vmatpush.msra.mxu0 %v145
    %v147 = vand.u32 %v37, 4294901760
    %148 = vmatpush.msra.mxu0 %v147
    %v149 = vand.u32 %v41, 4294901760
    %v150 = vsub.f32 %v41, %v149
    %v151 = vand.u32 %v150, 4294901760
    %152 = vmatmul.f32.gmra.mxu0 %v151
    %v153 = vpop.f32.mrf.mxu0
    %v154 = vadd.f32 %v129, %v153
    %155 = vdwg.mxu0
    %156 = vmatpush.msra.mxu0 0.0
    %157 = vmatpush.msra.mxu0 0.0
    %158 = vmatpush.msra.mxu0 0.0
    %159 = vmatpush.msra.mxu0 0.0
    %160 = vmatpush.msra.mxu0 0.0
    %161 = vmatpush.msra.mxu0 0.0
    %162 = vmatpush.msra.mxu0 0.0
    %163 = vmatpush.msra.mxu0 0.0
    %164 = vmatpush.msra.mxu0 0.0
    %165 = vmatpush.msra.mxu0 0.0
    %166 = vmatpush.msra.mxu0 0.0
    %167 = vmatpush.msra.mxu0 0.0
    %168 = vmatpush.msra.mxu0 0.0
    %169 = vmatpush.msra.mxu0 0.0
    %v170 = vand.u32 %v45, 4294901760
    %v171 = vsub.f32 %v45, %v170
    %v172 = vand.u32 %v171, 4294901760
    %173 = vmatpush.msra.mxu0 %v172
    %v174 = vand.u32 %v37, 4294901760
    %v175 = vsub.f32 %v37, %v174
    %v176 = vand.u32 %v175, 4294901760
    %177 = vmatpush.msra.mxu0 %v176
    %v178 = vand.u32 %v41, 4294901760
    %179 = vmatmul.f32.gmra.mxu0 %v178
    %v180 = vpop.f32.mrf.mxu0
    %v181 = vadd.f32 %v154, %v180
    %182 = vdwg.mxu0
    %183 = vmatpush.msra.mxu0 0.0
    %184 = vmatpush.msra.mxu0 0.0
    %185 = vmatpush.msra.mxu0 0.0
    %186 = vmatpush.msra.mxu0 0.0
    %187 = vmatpush.msra.mxu0 0.0
    %188 = vmatpush.msra.mxu0 0.0
    %189 = vmatpush.msra.mxu0 0.0
    %190 = vmatpush.msra.mxu0 0.0
    %191 = vmatpush.msra.mxu0 0.0
    %192 = vmatpush.msra.mxu0 0.0
    %193 = vmatpush.msra.mxu0 0.0
    %194 = vmatpush.msra.mxu0 0.0
    %195 = vmatpush.msra.mxu0 0.0
    %196 = vmatpush.msra.mxu0 0.0
    %v197 = vand.u32 %v45, 4294901760
    %198 = vmatpush.msra.mxu0 %v197
    %v199 = vand.u32 %v37, 4294901760
    %200 = vmatpush.msra.mxu0 %v199
    %v201 = vand.u32 %v41, 4294901760
    %202 = vmatmul.f32.gmra.mxu0 %v201
    %v203 = vpop.f32.mrf.mxu0
    %v204 = vadd.f32 %v181, %v203
    %205 = vdwg.mxu0
    %206 = vst [vmem:[#allocation5] sm:$0xff] %v204
    // Predicated region
    $region14: #{tpu_custom_call.1} parent=1 // pred_check
      _
    $region15: #{tpu_custom_call.1} parent=1 // pred_check_branch
      %208 = sbr.rel (0) target = $region17
    $region16: #{tpu_custom_call.1} parent=1 // pred_region
      %210 = vsyncadd [#allocation4], 0
      %s212 = sshll.u32 [#allocation5], 4
      %s213 = int_to_ptr.vmem [resolvable:$true] %s212
      %s214 = sshll.u32 %s2, 4
      %s215 = int_to_ptr.hbm [resolvable:$true] %s214
      %217 = dma.vmem_to_hbm [thread:$0]  %s213, 128, %s215, [#allocation4]
    $region17: #{tpu_custom_call.1} parent=1 // pred_fallthru
      _
    // Predicated region
    $region18: #{tpu_custom_call.1} parent=1 // pred_check
      _
    $region19: #{tpu_custom_call.1} parent=1 // pred_check_branch
      %219 = sbr.rel (0) target = $region21
    $region20: #{tpu_custom_call.1} parent=1 // pred_region
      %221 = dma.done [#allocation4], 128
    $region21: #{tpu_custom_call.1} parent=1 // pred_fallthru
      _
    %222 = vsyncpa [#allocation3], 1
    %223 = vsyncpa [#allocation4], 1

</llo_original>
